<compile_context>
chip_gen: v5e
topology: v5e:2x2
jax: 0.10.0
libtpu: 0.0.40
codegen_flags: <defaults>
</compile_context>

<pallas_src>
import functools

import jax
import jax.numpy as jnp
from jax.experimental import pallas as pl
from jax.experimental.pallas import tpu as pltpu

_EPS = 1e-9


def _round_up(x, k):
    return ((x + k - 1) // k) * k


def _pick_tile_n(n_rows, n_classes, dtypes):
    """Row-tile size; dtype/stream-count aware VMEM accounting.

    Each stream is double-buffered by the BlockSpec pipeline; keep the streamed
    buffers under ~24 MiB so that, together with in-kernel f32 temporaries, the
    kernel stays inside the 48 MiB vmem_limit (v7x has 64 MiB physical VMEM).
    Multiple of 16 so bf16 inputs also tile cleanly on sublanes.
    """
    budget_bytes = 24 * 1024 * 1024
    bytes_per_row = sum(2 * n_classes * jnp.dtype(dt).itemsize for dt in dtypes)
    tile = budget_bytes // max(bytes_per_row, 1)
    tile = max(16, min(2048, (tile // 16) * 16))
    return min(tile, _round_up(n_rows, 16))


def _branch_rows(xw, xs, t):
    """Per-row (T, 1) contribution of sup + KL_w + KL_s, EXCLUDING the sum(t*log t) term.

    xw, xs, t: (T, C) f32.
    """
    # Softmax statistics (shared by sup and KL terms); softmax itself never materialized.
    mw = jnp.max(xw, axis=1, keepdims=True)
    sh_w = xw - mw
    e_w = jnp.exp(sh_w)
    s_w = jnp.sum(e_w, axis=1, keepdims=True)
    ms = jnp.max(xs, axis=1, keepdims=True)
    sh_s = xs - ms
    e_s = jnp.exp(sh_s)
    s_s = jnp.sum(e_s, axis=1, keepdims=True)
    lse_sum = jnp.log(s_w * s_s)                                     # log s_w + log s_s  (T,1)

    # sup: rows where target == 0 (non-candidate classes).
    #   -log(|1-p_w|+eps) - log(|1-p_s|+eps)
    #     = (log s_w + log s_s) - log((s_w-e_w+eps*s_w) * (s_s-e_s+eps*s_s))
    neg = (t == 0.0).astype(jnp.float32)
    d = (s_w - e_w + _EPS * s_w) * (s_s - e_s + _EPS * s_s)          # (T, C), > 0
    sup_row = (lse_sum * jnp.sum(neg, axis=1, keepdims=True)
               - jnp.sum(neg * jnp.log(d), axis=1, keepdims=True))   # (T, 1)

    # KL (both directions' targets identical): sum(t*logt) handled outside the kernel.
    #   KL(logsm(x) || t) = sum(t*log t) - sum(t*sh) + lse * sum(t)
    t_sum = jnp.sum(t, axis=1, keepdims=True)                        # (T, 1)
    cross = jnp.sum(t * (sh_w + sh_s), axis=1, keepdims=True)        # (T, 1)
    kl_row = lse_sum * t_sum - cross                                 # (T, 1)

    return sup_row + kl_row


def _pll_fused_kernel(xw_ref, xs_ref, t_ref, xwm_ref, xsm_ref, tm_ref,
                      out_ref, *, n_rows, tile_n, mixup):
    i = pl.program_id(0)
    rows = i * tile_n + jax.lax.broadcasted_iota(jnp.int32, (tile_n, 1), 0)
    valid = (rows < n_rows).astype(jnp.float32)

    main = _branch_rows(xw_ref[...].astype(jnp.float32),
                        xs_ref[...].astype(jnp.float32),
                        t_ref[...].astype(jnp.float32))
    mix = _branch_rows(xwm_ref[...].astype(jnp.float32),
                       xsm_ref[...].astype(jnp.float32),
                       tm_ref[...].astype(jnp.float32))
    out_ref[...] = valid * (main + mixup * mix)


def _pll_single_kernel(xw_ref, xs_ref, t_ref, out_ref, *, n_rows, tile_n):
    i = pl.program_id(0)
    rows = i * tile_n + jax.lax.broadcasted_iota(jnp.int32, (tile_n, 1), 0)
    valid = (rows < n_rows).astype(jnp.float32)
    out_ref[...] = valid * _branch_rows(xw_ref[...].astype(jnp.float32),
                                        xs_ref[...].astype(jnp.float32),
                                        t_ref[...].astype(jnp.float32))


_COMPILER_PARAMS = pltpu.CompilerParams(
    dimension_semantics=("parallel",),        # independent per-tile partials -> megacore-splittable
    vmem_limit_bytes=48 * 1024 * 1024,
)


def _xlogx_sum(t):
    """sum_{ij} t*log(t) with 0*log(0) := 0 (hoisted out of the kernel)."""
    t = t.astype(jnp.float32)
    return jnp.sum(jnp.where(t > 0.0, t * jnp.log(jnp.where(t > 0.0, t, 1.0)), 0.0))


def _pll_loss_fused(output_w, output_s, target, output_w_mix, output_s_mix,
                    target_mix, mixup):
    """sup1 + con + mixup*(sup2 + con2) with both branches fused in one pallas_call."""
    n, c = output_w.shape
    assert output_w_mix.shape == (n, c) and target.shape == (n, c)
    streams = [output_w, output_s, target, output_w_mix, output_s_mix, target_mix]
    tile_n = _pick_tile_n(n, c, [a.dtype for a in streams])
    n_pad = _round_up(n, tile_n)
    if n_pad != n:
        streams = [jnp.pad(a, ((0, n_pad - n), (0, 0))) for a in streams]

    big_spec = pl.BlockSpec((tile_n, c), lambda i: (i, 0))
    per_row = pl.pallas_call(
        functools.partial(_pll_fused_kernel, n_rows=n, tile_n=tile_n,
                          mixup=float(mixup)),
        out_shape=jax.ShapeDtypeStruct((n_pad, 1), jnp.float32),
        grid=(n_pad // tile_n,),
        in_specs=[big_spec] * 6,
        out_specs=pl.BlockSpec((tile_n, 1), lambda i: (i, 0)),
        compiler_params=_COMPILER_PARAMS,
    )(*streams)

    tlogt = 2.0 * _xlogx_sum(target) + float(mixup) * 2.0 * _xlogx_sum(target_mix)
    return (jnp.sum(per_row) + tlogt) / float(n)


def _pll_loss_single(output_w, output_s, target):
    """sup1 + con only (update_target=False path)."""
    n, c = output_w.shape
    streams = [output_w, output_s, target]
    tile_n = _pick_tile_n(n, c, [a.dtype for a in streams])
    n_pad = _round_up(n, tile_n)
    if n_pad != n:
        streams = [jnp.pad(a, ((0, n_pad - n), (0, 0))) for a in streams]

    big_spec = pl.BlockSpec((tile_n, c), lambda i: (i, 0))
    per_row = pl.pallas_call(
        functools.partial(_pll_single_kernel, n_rows=n, tile_n=tile_n),
        out_shape=jax.ShapeDtypeStruct((n_pad, 1), jnp.float32),
        grid=(n_pad // tile_n,),
        in_specs=[big_spec] * 3,
        out_specs=pl.BlockSpec((tile_n, 1), lambda i: (i, 0)),
        compiler_params=_COMPILER_PARAMS,
    )(*streams)

    return (jnp.sum(per_row) + 2.0 * _xlogx_sum(target)) / float(n)


def corr_records_forward(output_w, output_s, output_w_mix, output_s_mix,
                         feat_w, feat_s, head_w, head_b, index, pseudo_label_mix,
                         confidence, init_confidence, feat_mean,
                         m=0.9, mixup=0.5, update_target=True):
    """Functional CORR_RECORDS.forward: returns (loss, new_confidence, new_feat_mean)."""
    # ---- loss (Pallas hot path) ----
    # Plain-JAX row gather of the confidence table (cheap for small/medium tables).
    target = confidence[index, :].astype(jnp.float32)
    if update_target:
        loss = _pll_loss_fused(output_w, output_s, target,
                               output_w_mix, output_s_mix, pseudo_label_mix, mixup)
    else:
        loss = _pll_loss_single(output_w, output_s, target)

    # ---- stateful side effects (plain-JAX glue, returned functionally) ----
    batch_feat = jnp.mean((feat_w + feat_s) * 0.5, axis=0)
    if feat_mean is None:
        feat_mean_new = (1.0 - m) * batch_feat
    else:
        feat_mean_new = m * feat_mean + (1.0 - m) * batch_feat

    confidence_new = confidence
    if update_target:
        # TODO(synk): `model.head` is an arbitrary nn.Module in the reference; modeled
        # here as the linear classifier head (head_w, head_b) applied in plain JAX.
        bias = jax.nn.softmax(feat_mean_new[None, :] @ head_w + head_b, axis=1)
        log_bias = jnp.log(bias + _EPS)
        pred_s = jax.nn.softmax(output_s.astype(jnp.float32) - log_bias, axis=1)
        pred_w = jax.nn.softmax(output_w.astype(jnp.float32) - log_bias, axis=1)
        revised = (init_confidence[index, :] > 0).astype(jnp.float32)
        r = (revised * pred_s) * (revised * pred_w)
        r = r / (jnp.sum(r, axis=1, keepdims=True) + _EPS)
        r = jnp.sqrt(r)
        r = r / (jnp.sum(r, axis=1, keepdims=True) + _EPS)
        new_rows = m * confidence[index, :] + (1.0 - m) * r
        confidence_new = confidence.at[index, :].set(new_rows)

    return loss, confidence_new, feat_mean_new


def corr_records_loss_reference(output_w, output_s, output_w_mix, output_s_mix,
                                confidence, index, pseudo_label_mix, mixup,
                                update_target=True):
    """Pure-JAX reference for the returned loss (mirrors the PyTorch forward)."""
    def kl_batchmean(logits, target):
        logq = jax.nn.log_softmax(logits.astype(jnp.float32), axis=1)
        t = target.astype(jnp.float32)
        plogp = jnp.where(t > 0, t * jnp.log(jnp.where(t > 0, t, 1.0)), 0.0)
        return jnp.sum(plogp - t * logq) / logits.shape[0]

    def branch(xw, xs, t):
        pw = jax.nn.softmax(xw.astype(jnp.float32), axis=1)
        ps = jax.nn.softmax(xs.astype(jnp.float32), axis=1)
        neg = (t == 0).astype(jnp.float32)
        sup = neg * (-jnp.log(jnp.abs(1.0 - pw) + _EPS)
                     - jnp.log(jnp.abs(1.0 - ps) + _EPS))
        return jnp.sum(sup) / xw.shape[0] + kl_batchmean(xw, t) + kl_batchmean(xs, t)

    loss = branch(output_w, output_s, confidence[index, :])
    if update_target:
        loss = loss + mixup * branch(output_w_mix, output_s_mix, pseudo_label_mix)
    return loss


if __name__ == "__main__":
    key = jax.random.PRNGKey(0)
    ks = jax.random.split(key, 10)

    N, C, M, D = 8, 128, 32, 64   # batch, classes, confidence-table rows, feature dim

    output_w = jax.random.normal(ks[0], (N, C), jnp.float32)
    output_s = jax.random.normal(ks[1], (N, C), jnp.float32)
    output_w_mix = jax.random.normal(ks[2], (N, C), jnp.float32)
    output_s_mix = jax.random.normal(ks[3], (N, C), jnp.float32)
    feat_w = jax.random.normal(ks[4], (N, D), jnp.float32)
    feat_s = jax.random.normal(ks[5], (N, D), jnp.float32)
    head_w = 0.05 * jax.random.normal(ks[6], (D, C), jnp.float32)
    head_b = jnp.zeros((C,), jnp.float32)

    # Partial-label style confidence: candidate mask, uniform over candidates (has exact zeros).
    cand = (jax.random.uniform(ks[7], (M, C)) < 0.5).astype(jnp.float32)
    cand = cand.at[:, 0].set(1.0)
    confidence = cand / jnp.sum(cand, axis=1, keepdims=True)
    init_confidence = confidence

    index = jax.random.permutation(ks[8], M)[:N].astype(jnp.int32)

    mix_cand = (jax.random.uniform(ks[9], (N, C)) < 0.5).astype(jnp.float32)
    mix_cand = mix_cand.at[:, 0].set(1.0)
    pseudo_label_mix = mix_cand / jnp.sum(mix_cand, axis=1, keepdims=True)

    # update_target=True path (fused two-branch kernel).
    loss, new_confidence, new_feat_mean = corr_records_forward(
        output_w, output_s, output_w_mix, output_s_mix, feat_w, feat_s,
        head_w, head_b, index, pseudo_label_mix,
        confidence, init_confidence, feat_mean=None,
        m=0.9, mixup=0.5, update_target=True)
    loss = jax.block_until_ready(loss)

    ref_loss = corr_records_loss_reference(
        output_w, output_s, output_w_mix, output_s_mix,
        confidence, index, pseudo_label_mix, mixup=0.5, update_target=True)
    assert jnp.allclose(loss, ref_loss, rtol=1e-3, atol=1e-3), (loss, ref_loss)

    # update_target=False path (single-branch kernel).
    loss_nt, _, _ = corr_records_forward(
        output_w, output_s, output_w_mix, output_s_mix, feat_w, feat_s,
        head_w, head_b, index, pseudo_label_mix,
        confidence, init_confidence, feat_mean=None,
        m=0.9, mixup=0.5, update_target=False)
    loss_nt = jax.block_until_ready(loss_nt)
    ref_loss_nt = corr_records_loss_reference(
        output_w, output_s, output_w_mix, output_s_mix,
        confidence, index, pseudo_label_mix, mixup=0.5, update_target=False)
    assert jnp.allclose(loss_nt, ref_loss_nt, rtol=1e-3, atol=1e-3), (loss_nt, ref_loss_nt)

    assert bool(jnp.all(jnp.isfinite(new_confidence)))
    assert bool(jnp.all(jnp.isfinite(new_feat_mean)))

    print("KERNEL_OK")
</pallas_src>

<mosaic_0001>
module attributes {stable_mosaic.version = 11 : i64} {
  func.func @_pll_fused_kernel(%arg0: i32, %arg1: memref<16x128xf32, #tpu.memory_space<vmem>>, %arg2: memref<16x128xf32, #tpu.memory_space<vmem>>, %arg3: memref<16x128xf32, #tpu.memory_space<vmem>>, %arg4: memref<16x128xf32, #tpu.memory_space<vmem>>, %arg5: memref<16x128xf32, #tpu.memory_space<vmem>>, %arg6: memref<16x128xf32, #tpu.memory_space<vmem>>, %arg7: memref<16x1xf32, #tpu.memory_space<vmem>>) attributes {dimension_semantics = [#tpu.dimension_semantics<parallel>], iteration_bounds = array<i64: 1>, scalar_prefetch = 0 : i64, scratch_operands = 0 : i64, tpu.core_type = #tpu.core_type<tc>, window_params = [{transform_indices = @transform_0, window_bounds = array<i64: 16, 128>}, {transform_indices = @transform_1, window_bounds = array<i64: 16, 128>}, {transform_indices = @transform_2, window_bounds = array<i64: 16, 128>}, {transform_indices = @transform_3, window_bounds = array<i64: 16, 128>}, {transform_indices = @transform_4, window_bounds = array<i64: 16, 128>}, {transform_indices = @transform_5, window_bounds = array<i64: 16, 128>}, {transform_indices = @transform_6, window_bounds = array<i64: 16, 1>}]} {
    %c16_i32 = arith.constant 16 : i32
    %0 = arith.muli %arg0, %c16_i32 : i32
    %1 = tpu.iota {dimensions = array<i32: 0>} : vector<16x1xi32>
    %2 = vector.broadcast %0 : i32 to vector<16x1xi32>
    %3 = arith.addi %2, %1 : vector<16x1xi32>
    %c8_i32 = arith.constant 8 : i32
    %4 = vector.broadcast %c8_i32 : i32 to vector<16x1xi32>
    %5 = arith.cmpi slt, %3, %4 : vector<16x1xi32>
    %6 = arith.extui %5 : vector<16x1xi1> to vector<16x1xi32>
    %7 = arith.sitofp %6 : vector<16x1xi32> to vector<16x1xf32>
    %c0 = arith.constant 0 : index
    %c0_0 = arith.constant 0 : index
    %8 = vector.load %arg1[%c0, %c0_0] : memref<16x128xf32, #tpu.memory_space<vmem>>, vector<16x128xf32>
    %c0_1 = arith.constant 0 : index
    %c0_2 = arith.constant 0 : index
    %9 = vector.load %arg2[%c0_1, %c0_2] : memref<16x128xf32, #tpu.memory_space<vmem>>, vector<16x128xf32>
    %c0_3 = arith.constant 0 : index
    %c0_4 = arith.constant 0 : index
    %10 = vector.load %arg3[%c0_3, %c0_4] : memref<16x128xf32, #tpu.memory_space<vmem>>, vector<16x128xf32>
    %cst = arith.constant dense<0xFF800000> : vector<16xf32>
    %11 = vector.multi_reduction <maximumf>, %8, %cst [1] : vector<16x128xf32> to vector<16xf32>
    %12 = vector.shape_cast %11 : vector<16xf32> to vector<16x1xf32>
    %13 = vector.broadcast %12 : vector<16x1xf32> to vector<16x128xf32>
    %14 = arith.subf %8, %13 : vector<16x128xf32>
    %15 = math.exp %14 : vector<16x128xf32>
    %cst_5 = arith.constant dense<0.000000e+00> : vector<16xf32>
    %16 = vector.multi_reduction <add>, %15, %cst_5 [1] : vector<16x128xf32> to vector<16xf32>
    %17 = vector.shape_cast %16 : vector<16xf32> to vector<16x1xf32>
    %cst_6 = arith.constant dense<0xFF800000> : vector<16xf32>
    %18 = vector.multi_reduction <maximumf>, %9, %cst_6 [1] : vector<16x128xf32> to vector<16xf32>
    %19 = vector.shape_cast %18 : vector<16xf32> to vector<16x1xf32>
    %20 = vector.broadcast %19 : vector<16x1xf32> to vector<16x128xf32>
    %21 = arith.subf %9, %20 : vector<16x128xf32>
    %22 = math.exp %21 : vector<16x128xf32>
    %cst_7 = arith.constant dense<0.000000e+00> : vector<16xf32>
    %23 = vector.multi_reduction <add>, %22, %cst_7 [1] : vector<16x128xf32> to vector<16xf32>
    %24 = vector.shape_cast %23 : vector<16xf32> to vector<16x1xf32>
    %25 = arith.mulf %17, %24 : vector<16x1xf32>
    %26 = math.log %25 : vector<16x1xf32>
    %cst_8 = arith.constant 0.000000e+00 : f32
    %27 = vector.broadcast %cst_8 : f32 to vector<16x128xf32>
    %28 = arith.cmpf oeq, %10, %27 : vector<16x128xf32>
    %29 = arith.extui %28 : vector<16x128xi1> to vector<16x128xi32>
    %30 = arith.sitofp %29 : vector<16x128xi32> to vector<16x128xf32>
    %31 = vector.broadcast %17 : vector<16x1xf32> to vector<16x128xf32>
    %32 = arith.subf %31, %15 : vector<16x128xf32>
    %cst_9 = arith.constant 9.99999971E-10 : f32
    %33 = vector.broadcast %cst_9 : f32 to vector<16x1xf32>
    %34 = arith.mulf %33, %17 : vector<16x1xf32>
    %35 = vector.broadcast %34 : vector<16x1xf32> to vector<16x128xf32>
    %36 = arith.addf %32, %35 : vector<16x128xf32>
    %37 = vector.broadcast %24 : vector<16x1xf32> to vector<16x128xf32>
    %38 = arith.subf %37, %22 : vector<16x128xf32>
    %cst_10 = arith.constant 9.99999971E-10 : f32
    %39 = vector.broadcast %cst_10 : f32 to vector<16x1xf32>
    %40 = arith.mulf %39, %24 : vector<16x1xf32>
    %41 = vector.broadcast %40 : vector<16x1xf32> to vector<16x128xf32>
    %42 = arith.addf %38, %41 : vector<16x128xf32>
    %43 = arith.mulf %36, %42 : vector<16x128xf32>
    %cst_11 = arith.constant dense<0.000000e+00> : vector<16xf32>
    %44 = vector.multi_reduction <add>, %30, %cst_11 [1] : vector<16x128xf32> to vector<16xf32>
    %45 = vector.shape_cast %44 : vector<16xf32> to vector<16x1xf32>
    %46 = arith.mulf %26, %45 : vector<16x1xf32>
    %47 = math.log %43 : vector<16x128xf32>
    %48 = arith.mulf %30, %47 : vector<16x128xf32>
    %cst_12 = arith.constant dense<0.000000e+00> : vector<16xf32>
    %49 = vector.multi_reduction <add>, %48, %cst_12 [1] : vector<16x128xf32> to vector<16xf32>
    %50 = vector.shape_cast %49 : vector<16xf32> to vector<16x1xf32>
    %51 = arith.subf %46, %50 : vector<16x1xf32>
    %cst_13 = arith.constant dense<0.000000e+00> : vector<16xf32>
    %52 = vector.multi_reduction <add>, %10, %cst_13 [1] : vector<16x128xf32> to vector<16xf32>
    %53 = vector.shape_cast %52 : vector<16xf32> to vector<16x1xf32>
    %54 = arith.addf %14, %21 : vector<16x128xf32>
    %55 = arith.mulf %10, %54 : vector<16x128xf32>
    %cst_14 = arith.constant dense<0.000000e+00> : vector<16xf32>
    %56 = vector.multi_reduction <add>, %55, %cst_14 [1] : vector<16x128xf32> to vector<16xf32>
    %57 = vector.shape_cast %56 : vector<16xf32> to vector<16x1xf32>
    %58 = arith.mulf %26, %53 : vector<16x1xf32>
    %59 = arith.subf %58, %57 : vector<16x1xf32>
    %60 = arith.addf %51, %59 : vector<16x1xf32>
    %c0_15 = arith.constant 0 : index
    %c0_16 = arith.constant 0 : index
    %61 = vector.load %arg4[%c0_15, %c0_16] : memref<16x128xf32, #tpu.memory_space<vmem>>, vector<16x128xf32>
    %c0_17 = arith.constant 0 : index
    %c0_18 = arith.constant 0 : index
    %62 = vector.load %arg5[%c0_17, %c0_18] : memref<16x128xf32, #tpu.memory_space<vmem>>, vector<16x128xf32>
    %c0_19 = arith.constant 0 : index
    %c0_20 = arith.constant 0 : index
    %63 = vector.load %arg6[%c0_19, %c0_20] : memref<16x128xf32, #tpu.memory_space<vmem>>, vector<16x128xf32>
    %cst_21 = arith.constant dense<0xFF800000> : vector<16xf32>
    %64 = vector.multi_reduction <maximumf>, %61, %cst_21 [1] : vector<16x128xf32> to vector<16xf32>
    %65 = vector.shape_cast %64 : vector<16xf32> to vector<16x1xf32>
    %66 = vector.broadcast %65 : vector<16x1xf32> to vector<16x128xf32>
    %67 = arith.subf %61, %66 : vector<16x128xf32>
    %68 = math.exp %67 : vector<16x128xf32>
    %cst_22 = arith.constant dense<0.000000e+00> : vector<16xf32>
    %69 = vector.multi_reduction <add>, %68, %cst_22 [1] : vector<16x128xf32> to vector<16xf32>
    %70 = vector.shape_cast %69 : vector<16xf32> to vector<16x1xf32>
    %cst_23 = arith.constant dense<0xFF800000> : vector<16xf32>
    %71 = vector.multi_reduction <maximumf>, %62, %cst_23 [1] : vector<16x128xf32> to vector<16xf32>
    %72 = vector.shape_cast %71 : vector<16xf32> to vector<16x1xf32>
    %73 = vector.broadcast %72 : vector<16x1xf32> to vector<16x128xf32>
    %74 = arith.subf %62, %73 : vector<16x128xf32>
    %75 = math.exp %74 : vector<16x128xf32>
    %cst_24 = arith.constant dense<0.000000e+00> : vector<16xf32>
    %76 = vector.multi_reduction <add>, %75, %cst_24 [1] : vector<16x128xf32> to vector<16xf32>
    %77 = vector.shape_cast %76 : vector<16xf32> to vector<16x1xf32>
    %78 = arith.mulf %70, %77 : vector<16x1xf32>
    %79 = math.log %78 : vector<16x1xf32>
    %cst_25 = arith.constant 0.000000e+00 : f32
    %80 = vector.broadcast %cst_25 : f32 to vector<16x128xf32>
    %81 = arith.cmpf oeq, %63, %80 : vector<16x128xf32>
    %82 = arith.extui %81 : vector<16x128xi1> to vector<16x128xi32>
    %83 = arith.sitofp %82 : vector<16x128xi32> to vector<16x128xf32>
    %84 = vector.broadcast %70 : vector<16x1xf32> to vector<16x128xf32>
    %85 = arith.subf %84, %68 : vector<16x128xf32>
    %cst_26 = arith.constant 9.99999971E-10 : f32
    %86 = vector.broadcast %cst_26 : f32 to vector<16x1xf32>
    %87 = arith.mulf %86, %70 : vector<16x1xf32>
    %88 = vector.broadcast %87 : vector<16x1xf32> to vector<16x128xf32>
    %89 = arith.addf %85, %88 : vector<16x128xf32>
    %90 = vector.broadcast %77 : vector<16x1xf32> to vector<16x128xf32>
    %91 = arith.subf %90, %75 : vector<16x128xf32>
    %cst_27 = arith.constant 9.99999971E-10 : f32
    %92 = vector.broadcast %cst_27 : f32 to vector<16x1xf32>
    %93 = arith.mulf %92, %77 : vector<16x1xf32>
    %94 = vector.broadcast %93 : vector<16x1xf32> to vector<16x128xf32>
    %95 = arith.addf %91, %94 : vector<16x128xf32>
    %96 = arith.mulf %89, %95 : vector<16x128xf32>
    %cst_28 = arith.constant dense<0.000000e+00> : vector<16xf32>
    %97 = vector.multi_reduction <add>, %83, %cst_28 [1] : vector<16x128xf32> to vector<16xf32>
    %98 = vector.shape_cast %97 : vector<16xf32> to vector<16x1xf32>
    %99 = arith.mulf %79, %98 : vector<16x1xf32>
    %100 = math.log %96 : vector<16x128xf32>
    %101 = arith.mulf %83, %100 : vector<16x128xf32>
    %cst_29 = arith.constant dense<0.000000e+00> : vector<16xf32>
    %102 = vector.multi_reduction <add>, %101, %cst_29 [1] : vector<16x128xf32> to vector<16xf32>
    %103 = vector.shape_cast %102 : vector<16xf32> to vector<16x1xf32>
    %104 = arith.subf %99, %103 : vector<16x1xf32>
    %cst_30 = arith.constant dense<0.000000e+00> : vector<16xf32>
    %105 = vector.multi_reduction <add>, %63, %cst_30 [1] : vector<16x128xf32> to vector<16xf32>
    %106 = vector.shape_cast %105 : vector<16xf32> to vector<16x1xf32>
    %107 = arith.addf %67, %74 : vector<16x128xf32>
    %108 = arith.mulf %63, %107 : vector<16x128xf32>
    %cst_31 = arith.constant dense<0.000000e+00> : vector<16xf32>
    %109 = vector.multi_reduction <add>, %108, %cst_31 [1] : vector<16x128xf32> to vector<16xf32>
    %110 = vector.shape_cast %109 : vector<16xf32> to vector<16x1xf32>
    %111 = arith.mulf %79, %106 : vector<16x1xf32>
    %112 = arith.subf %111, %110 : vector<16x1xf32>
    %113 = arith.addf %104, %112 : vector<16x1xf32>
    %cst_32 = arith.constant 5.000000e-01 : f32
    %114 = vector.broadcast %cst_32 : f32 to vector<16x1xf32>
    %115 = arith.mulf %114, %113 : vector<16x1xf32>
    %116 = arith.addf %60, %115 : vector<16x1xf32>
    %117 = arith.mulf %7, %116 : vector<16x1xf32>
    %c0_33 = arith.constant 0 : index
    %c0_34 = arith.constant 0 : index
    %118 = vector.load %arg7[%c0_33, %c0_34] : memref<16x1xf32, #tpu.memory_space<vmem>>, vector<16x1xf32>
    tpu.vector_store %arg7[%c0_33, %c0_34], %117 {strides = array<i32>} : memref<16x1xf32, #tpu.memory_space<vmem>>, vector<16x1xf32>,
    return
  }
  func.func @transform_0(%arg0: i32) -> (i32, i32) {
    %c0_i32 = arith.constant 0 : i32
    %c0_i32_0 = arith.constant 0 : i32
    return %arg0, %c0_i32 : i32, i32
  }
  func.func @transform_1(%arg0: i32) -> (i32, i32) {
    %c0_i32 = arith.constant 0 : i32
    %c0_i32_0 = arith.constant 0 : i32
    return %arg0, %c0_i32 : i32, i32
  }
  func.func @transform_2(%arg0: i32) -> (i32, i32) {
    %c0_i32 = arith.constant 0 : i32
    %c0_i32_0 = arith.constant 0 : i32
    return %arg0, %c0_i32 : i32, i32
  }
  func.func @transform_3(%arg0: i32) -> (i32, i32) {
    %c0_i32 = arith.constant 0 : i32
    %c0_i32_0 = arith.constant 0 : i32
    return %arg0, %c0_i32 : i32, i32
  }
  func.func @transform_4(%arg0: i32) -> (i32, i32) {
    %c0_i32 = arith.constant 0 : i32
    %c0_i32_0 = arith.constant 0 : i32
    return %arg0, %c0_i32 : i32, i32
  }
  func.func @transform_5(%arg0: i32) -> (i32, i32) {
    %c0_i32 = arith.constant 0 : i32
    %c0_i32_0 = arith.constant 0 : i32
    return %arg0, %c0_i32 : i32, i32
  }
  func.func @transform_6(%arg0: i32) -> (i32, i32) {
    %c0_i32 = arith.constant 0 : i32
    %c0_i32_0 = arith.constant 0 : i32
    return %arg0, %c0_i32 : i32, i32
  }
}

</mosaic_0001>

<llo_original>
// kernel: tpu_custom_call.1
$region0: #{tpu_custom_call.1}
  #allocation0 [shape = 'u32[]', space=smem, size = 0x4, offset = 0x4, fixed_abs, tag = 'smem constant byte address 0x4 - core index']
  #allocation1 [shape = 'u32[72,128]{1,0:T(1,128)}', space=vmem, size = 0x9000, scoped, tag = 'internal scratch']
  %s0 = inlined_call_operand.hbm [shape: f32[16,128], index: 0, kind: input, shape index: {}]
  %s1 = inlined_call_operand.hbm [shape: f32[16,128], index: 1, kind: input, shape index: {}]
  %s2 = inlined_call_operand.hbm [shape: f32[16,128], index: 2, kind: input, shape index: {}]
  %s3 = inlined_call_operand.hbm [shape: f32[16,128], index: 3, kind: input, shape index: {}]
  %s4 = inlined_call_operand.hbm [shape: f32[16,128], index: 4, kind: input, shape index: {}]
  %s5 = inlined_call_operand.hbm [shape: f32[16,128], index: 5, kind: input, shape index: {}]
  %s6 = inlined_call_operand.vmem [shape: f32[16,1], index: 6, kind: output, shape index: {}]
  %s7 = sld [smem:[#allocation0]]
  $region58: #{tpu_custom_call.1} parent=0
    _
  %s9 = ssub.s32 1, %s7
  %s10 = scalar_select 0, %s9, %s7
  $region1: #{tpu_custom_call.1} parent=0
    #allocation2 [shape = 'u8[8192]{0}', space=vmem, size = 0x2000, scoped, tag = 'input window, operand 0, single buffered']
    #allocation3 [shape = 's32[1]{0}', space=sflag, size = 0x4, scoped, tag = 'scoped memory for tpu_custom_call.1']
    #allocation4 [shape = 'u8[8192]{0}', space=vmem, size = 0x2000, scoped, tag = 'input window, operand 1, single buffered']
    #allocation5 [shape = 's32[1]{0}', space=sflag, size = 0x4, scoped, tag = 'scoped memory for tpu_custom_call.1']
    #allocation6 [shape = 'u8[8192]{0}', space=vmem, size = 0x2000, scoped, tag = 'input window, operand 2, single buffered']
    #allocation7 [shape = 'u8[8192]{0}', space=vmem, size = 0x2000, scoped, tag = 'input window, operand 3, single buffered']
    #allocation8 [shape = 's32[1]{0}', space=sflag, size = 0x4, scoped, tag = 'scoped memory for tpu_custom_call.1']
    #allocation9 [shape = 'u8[8192]{0}', space=vmem, size = 0x2000, scoped, tag = 'input window, operand 4, single buffered']
    #allocation10 [shape = 'u8[8192]{0}', space=vmem, size = 0x2000, scoped, tag = 'input window, operand 5, single buffered']
    #allocation11 [shape = 's32[1]{0}', space=sflag, size = 0x4, scoped, tag = 'scoped memory for tpu_custom_call.1']
    %11 = vsyncpa [#allocation3], 0
    %12 = vsyncpa [#allocation5], 0
    %13 = vsyncpa [#allocation8], 0
    %14 = vsyncpa [#allocation11], 0
    // Predicated region
    $region2: #{tpu_custom_call.1} parent=1 // pred_check
      _
    $region3: #{tpu_custom_call.1} parent=1 // pred_check_branch
      %16 = sbr.rel (0) target = $region5
    $region4: #{tpu_custom_call.1} parent=1 // pred_region
      %18 = vsyncadd [#allocation3], 0
      %s19 = sshll.u32 %s0, 4
      %s20 = int_to_ptr.hbm [resolvable:$true] %s19
      %s21 = sshll.u32 [#allocation2], 4
      %s22 = int_to_ptr.vmem [resolvable:$true] %s21
      %27 = dma.hbm_to_vmem [thread:$0]  %s20, 256, %s22, [#allocation3], 128, 128, 8
    $region5: #{tpu_custom_call.1} parent=1 // pred_fallthru
      _
    // Predicated region
    $region6: #{tpu_custom_call.1} parent=1 // pred_check
      _
    $region7: #{tpu_custom_call.1} parent=1 // pred_check_branch
      %29 = sbr.rel (0) target = $region9
    $region8: #{tpu_custom_call.1} parent=1 // pred_region
      %31 = vsyncadd [#allocation5], 0
      %s32 = sshll.u32 %s1, 4
      %s33 = int_to_ptr.hbm [resolvable:$true] %s32
      %s34 = sshll.u32 [#allocation4], 4
      %s35 = int_to_ptr.vmem [resolvable:$true] %s34
      %40 = dma.hbm_to_vmem [thread:$0]  %s33, 256, %s35, [#allocation5], 128, 128, 8
    $region9: #{tpu_custom_call.1} parent=1 // pred_fallthru
      _
    // Predicated region
    $region10: #{tpu_custom_call.1} parent=1 // pred_check
      _
    $region11: #{tpu_custom_call.1} parent=1 // pred_check_branch
      %42 = sbr.rel (0) target = $region13
    $region12: #{tpu_custom_call.1} parent=1 // pred_region
      %44 = vsyncadd [#allocation5], 0
      %s45 = sshll.u32 %s2, 4
      %s46 = int_to_ptr.hbm [resolvable:$true] %s45
      %s47 = sshll.u32 [#allocation6], 4
      %s48 = int_to_ptr.vmem [resolvable:$true] %s47
      %53 = dma.hbm_to_vmem [thread:$0]  %s46, 256, %s48, [#allocation5], 128, 128, 8
    $region13: #{tpu_custom_call.1} parent=1 // pred_fallthru
      _
    // Predicated region
    $region14: #{tpu_custom_call.1} parent=1 // pred_check
      _
    $region15: #{tpu_custom_call.1} parent=1 // pred_check_branch
      %55 = sbr.rel (0) target = $region17
    $region16: #{tpu_custom_call.1} parent=1 // pred_region
      %57 = vsyncadd [#allocation8], 0
      %s58 = sshll.u32 %s3, 4
      %s59 = int_to_ptr.hbm [resolvable:$true] %s58
      %s60 = sshll.u32 [#allocation7], 4
      %s61 = int_to_ptr.vmem [resolvable:$true] %s60
      %66 = dma.hbm_to_vmem [thread:$0]  %s59, 256, %s61, [#allocation8], 128, 128, 8
    $region17: #{tpu_custom_call.1} parent=1 // pred_fallthru
      _
    // Predicated region
    $region18: #{tpu_custom_call.1} parent=1 // pred_check
      _
    $region19: #{tpu_custom_call.1} parent=1 // pred_check_branch
      %68 = sbr.rel (0) target = $region21
    $region20: #{tpu_custom_call.1} parent=1 // pred_region
      %70 = vsyncadd [#allocation8], 0
      %s71 = sshll.u32 %s4, 4
      %s72 = int_to_ptr.hbm [resolvable:$true] %s71
      %s73 = sshll.u32 [#allocation9], 4
      %s74 = int_to_ptr.vmem [resolvable:$true] %s73
      %79 = dma.hbm_to_vmem [thread:$0]  %s72, 256, %s74, [#allocation8], 128, 128, 8
    $region21: #{tpu_custom_call.1} parent=1 // pred_fallthru
      _
    // Predicated region
    $region22: #{tpu_custom_call.1} parent=1 // pred_check
      _
    $region23: #{tpu_custom_call.1} parent=1 // pred_check_branch
      %81 = sbr.rel (0) target = $region25
    $region24: #{tpu_custom_call.1} parent=1 // pred_region
      %83 = vsyncadd [#allocation11], 0
      %s84 = sshll.u32 %s5, 4
      %s85 = int_to_ptr.hbm [resolvable:$true] %s84
      %s86 = sshll.u32 [#allocation10], 4
      %s87 = int_to_ptr.vmem [resolvable:$true] %s86
      %92 = dma.hbm_to_vmem [thread:$0]  %s85, 256, %s87, [#allocation11], 128, 128, 8
    $region25: #{tpu_custom_call.1} parent=1 // pred_fallthru
      _
    // Predicated region
    $region26: #{tpu_custom_call.1} parent=1 // pred_check
      _
    $region27: #{tpu_custom_call.1} parent=1 // pred_check_branch
      %94 = sbr.rel (0) target = $region29
    $region28: #{tpu_custom_call.1} parent=1 // pred_region
      %96 = dma.done [#allocation3], 256
    $region29: #{tpu_custom_call.1} parent=1 // pred_fallthru
      _
    // Predicated region
    $region30: #{tpu_custom_call.1} parent=1 // pred_check
      _
    $region31: #{tpu_custom_call.1} parent=1 // pred_check_branch
      %98 = sbr.rel (0) target = $region33
    $region32: #{tpu_custom_call.1} parent=1 // pred_region
      %100 = dma.done [#allocation5], 256
    $region33: #{tpu_custom_call.1} parent=1 // pred_fallthru
      _
    // Predicated region
    $region34: #{tpu_custom_call.1} parent=1 // pred_check
      _
    $region35: #{tpu_custom_call.1} parent=1 // pred_check_branch
      %102 = sbr.rel (0) target = $region37
    $region36: #{tpu_custom_call.1} parent=1 // pred_region
      %104 = dma.done [#allocation5], 256
    $region37: #{tpu_custom_call.1} parent=1 // pred_fallthru
      _
    // Predicated region
    $region38: #{tpu_custom_call.1} parent=1 // pred_check
      _
    $region39: #{tpu_custom_call.1} parent=1 // pred_check_branch
      %106 = sbr.rel (0) target = $region41
    $region40: #{tpu_custom_call.1} parent=1 // pred_region
      %108 = dma.done [#allocation8], 256
    $region41: #{tpu_custom_call.1} parent=1 // pred_fallthru
      _
    // Predicated region
    $region42: #{tpu_custom_call.1} parent=1 // pred_check
      _
    $region43: #{tpu_custom_call.1} parent=1 // pred_check_branch
      %110 = sbr.rel (0) target = $region45
    $region44: #{tpu_custom_call.1} parent=1 // pred_region
      %112 = dma.done [#allocation8], 256
    $region45: #{tpu_custom_call.1} parent=1 // pred_fallthru
      _
    // Predicated region
    $region46: #{tpu_custom_call.1} parent=1 // pred_check
      _
    $region47: #{tpu_custom_call.1} parent=1 // pred_check_branch
      %114 = sbr.rel (0) target = $region49
    $region48: #{tpu_custom_call.1} parent=1 // pred_region
      %116 = dma.done [#allocation11], 256
    $region49: #{tpu_custom_call.1} parent=1 // pred_fallthru
      _
    %s117 = smul.u32 0, 16
    %v118 = vlaneseq
    %v119 = vshrl.u32 %v118, 7
    %v120 = vadd.s32 %v119, 8
    %v121 = vstv %s117
    %v122 = vadd.s32 %v121, %v119
    %v123 = vadd.s32 %v121, %v120
    %vm124 = vcmp.lt.s32.totalorder %v122, 8
    %vm125 = vcmp.lt.s32.totalorder %v123, 8
    %v126 = vsel %vm124, 1, 0
    %v127 = vsel %vm125, 1, 0
    %v128 = vcvt.s32.f32 %v126
    %v129 = vcvt.s32.f32 %v127
    %v130 = vld [vmem:[#allocation2] sm:$0xff]
    %v131 = vld [vmem:[#allocation2 + $0x8] sm:$0xff]
    %v132 = vld [vmem:[#allocation4] sm:$0xff]
    %v133 = vld [vmem:[#allocation4 + $0x8] sm:$0xff]
    %v134 = vld [vmem:[#allocation6] sm:$0xff]
    %v135 = vld [vmem:[#allocation6 + $0x8] sm:$0xff]
    %136 = vmax.xlane.f32.xlu0 %v130
    %v137 = vpop.xlane.xlu0 %136
    %138 = vmax.xlane.f32.xlu0 %v131
    %v139 = vpop.xlane.xlu0 %138
    %v140 = vsub.f32 %v130, %v137
    %v141 = vsub.f32 %v131, %v139
    %v142 = vmul.f32 %v140, 1.442695
    %v143 = vpow.pop %v142
    %v144 = vmul.f32 %v141, 1.442695
    %v145 = vpow.pop %v144
    %146 = vadd.xlane.f32.xlu0 %v143
    %v147 = vpop.xlane.xlu0 %146
    %148 = vadd.xlane.f32.xlu0 %v145
    %v149 = vpop.xlane.xlu0 %148
    %150 = vmax.xlane.f32.xlu0 %v132
    %v151 = vpop.xlane.xlu0 %150
    %152 = vmax.xlane.f32.xlu0 %v133
    %v153 = vpop.xlane.xlu0 %152
    %v154 = vsub.f32 %v132, %v151
    %v155 = vsub.f32 %v133, %v153
    %v156 = vmul.f32 %v154, 1.442695
    %v157 = vpow.pop %v156
    %v158 = vmul.f32 %v155, 1.442695
    %v159 = vpow.pop %v158
    %160 = vadd.xlane.f32.xlu0 %v157
    %v161 = vpop.xlane.xlu0 %160
    %162 = vadd.xlane.f32.xlu0 %v159
    %v163 = vpop.xlane.xlu0 %162
    %v164 = vmul.f32 %v147, %v161
    %v165 = vmul.f32 %v149, %v163
    %v166 = vlog2.pop %v164
    %v167 = vmul.f32 %v166, 0.6931472
    %v168 = vlog2.pop %v165
    %v169 = vmul.f32 %v168, 0.6931472
    %vm170 = vcmp.eq.f32.partialorder %v134, 0.0
    %vm171 = vcmp.eq.f32.partialorder %v135, 0.0
    %v172 = vsel %vm170, 1, 0
    %v173 = vsel %vm171, 1, 0
    %v174 = vcvt.s32.f32 %v172
    %v175 = vcvt.s32.f32 %v173
    %v176 = vsub.f32 %v147, %v143
    %v177 = vsub.f32 %v149, %v145
    %v178 = vmul.f32 %v147, 1e-09
    %v179 = vmul.f32 %v149, 1e-09
    %v180 = vadd.f32 %v176, %v178
    %v181 = vadd.f32 %v177, %v179
    %v182 = vsub.f32 %v161, %v157
    %v183 = vsub.f32 %v163, %v159
    %v184 = vmul.f32 %v161, 1e-09
    %v185 = vmul.f32 %v163, 1e-09
    %v186 = vadd.f32 %v182, %v184
    %v187 = vadd.f32 %v183, %v185
    %v188 = vmul.f32 %v180, %v186
    %v189 = vmul.f32 %v181, %v187
    %190 = vadd.xlane.f32.xlu0 %v174
    %v191 = vpop.xlane.xlu0 %190
    %192 = vadd.xlane.f32.xlu0 %v175
    %v193 = vpop.xlane.xlu0 %192
    %v194 = vmul.f32 %v167, %v191
    %v195 = vmul.f32 %v169, %v193
    %v196 = vlog2.pop %v188
    %v197 = vmul.f32 %v196, 0.6931472
    %v198 = vlog2.pop %v189
    %v199 = vmul.f32 %v198, 0.6931472
    %v200 = vmul.f32 %v174, %v197
    %v201 = vmul.f32 %v175, %v199
    %202 = vadd.xlane.f32.xlu0 %v200
    %v203 = vpop.xlane.xlu0 %202
    %204 = vadd.xlane.f32.xlu0 %v201
    %v205 = vpop.xlane.xlu0 %204
    %v206 = vsub.f32 %v194, %v203
    %v207 = vsub.f32 %v195, %v205
    %208 = vadd.xlane.f32.xlu0 %v134
    %v209 = vpop.xlane.xlu0 %208
    %210 = vadd.xlane.f32.xlu0 %v135
    %v211 = vpop.xlane.xlu0 %210
    %v212 = vadd.f32 %v140, %v154
    %v213 = vadd.f32 %v141, %v155
    %v214 = vmul.f32 %v134, %v212
    %v215 = vmul.f32 %v135, %v213
    %216 = vadd.xlane.f32.xlu0 %v214
    %v217 = vpop.xlane.xlu0 %216
    %218 = vadd.xlane.f32.xlu0 %v215
    %v219 = vpop.xlane.xlu0 %218
    %v220 = vmul.f32 %v167, %v209
    %v221 = vmul.f32 %v169, %v211
    %v222 = vsub.f32 %v220, %v217
    %v223 = vsub.f32 %v221, %v219
    %v224 = vadd.f32 %v206, %v222
    %v225 = vadd.f32 %v207, %v223
    %v226 = vld [vmem:[#allocation7] sm:$0xff]
    %v227 = vld [vmem:[#allocation7 + $0x8] sm:$0xff]
    %v228 = vld [vmem:[#allocation9] sm:$0xff]
    %v229 = vld [vmem:[#allocation9 + $0x8] sm:$0xff]
    %v230 = vld [vmem:[#allocation10] sm:$0xff]
    %v231 = vld [vmem:[#allocation10 + $0x8] sm:$0xff]
    %232 = vmax.xlane.f32.xlu0 %v226
    %v233 = vpop.xlane.xlu0 %232
    %234 = vmax.xlane.f32.xlu0 %v227
    %v235 = vpop.xlane.xlu0 %234
    %v236 = vsub.f32 %v226, %v233
    %v237 = vsub.f32 %v227, %v235
    %v238 = vmul.f32 %v236, 1.442695
    %v239 = vpow.pop %v238
    %v240 = vmul.f32 %v237, 1.442695
    %v241 = vpow.pop %v240
    %242 = vadd.xlane.f32.xlu0 %v239
    %v243 = vpop.xlane.xlu0 %242
    %244 = vadd.xlane.f32.xlu0 %v241
    %v245 = vpop.xlane.xlu0 %244
    %246 = vmax.xlane.f32.xlu0 %v228
    %v247 = vpop.xlane.xlu0 %246
    %248 = vmax.xlane.f32.xlu0 %v229
    %v249 = vpop.xlane.xlu0 %248
    %v250 = vsub.f32 %v228, %v247
    %v251 = vsub.f32 %v229, %v249
    %v252 = vmul.f32 %v250, 1.442695
    %v253 = vpow.pop %v252
    %v254 = vmul.f32 %v251, 1.442695
    %v255 = vpow.pop %v254
    %256 = vadd.xlane.f32.xlu0 %v253
    %v257 = vpop.xlane.xlu0 %256
    %258 = vadd.xlane.f32.xlu0 %v255
    %v259 = vpop.xlane.xlu0 %258
    %v260 = vmul.f32 %v243, %v257
    %v261 = vmul.f32 %v245, %v259
    %v262 = vlog2.pop %v260
    %v263 = vmul.f32 %v262, 0.6931472
    %v264 = vlog2.pop %v261
    %v265 = vmul.f32 %v264, 0.6931472
    %vm266 = vcmp.eq.f32.partialorder %v230, 0.0
    %vm267 = vcmp.eq.f32.partialorder %v231, 0.0
    %v268 = vsel %vm266, 1, 0
    %v269 = vsel %vm267, 1, 0
    %v270 = vcvt.s32.f32 %v268
    %v271 = vcvt.s32.f32 %v269
    %v272 = vsub.f32 %v243, %v239
    %v273 = vsub.f32 %v245, %v241
    %v274 = vmul.f32 %v243, 1e-09
    %v275 = vmul.f32 %v245, 1e-09
    %v276 = vadd.f32 %v272, %v274
    %v277 = vadd.f32 %v273, %v275
    %v278 = vsub.f32 %v257, %v253
    %v279 = vsub.f32 %v259, %v255
    %v280 = vmul.f32 %v257, 1e-09
    %v281 = vmul.f32 %v259, 1e-09
    %v282 = vadd.f32 %v278, %v280
    %v283 = vadd.f32 %v279, %v281
    %v284 = vmul.f32 %v276, %v282
    %v285 = vmul.f32 %v277, %v283
    %286 = vadd.xlane.f32.xlu0 %v270
    %v287 = vpop.xlane.xlu0 %286
    %288 = vadd.xlane.f32.xlu0 %v271
    %v289 = vpop.xlane.xlu0 %288
    %v290 = vmul.f32 %v263, %v287
    %v291 = vmul.f32 %v265, %v289
    %v292 = vlog2.pop %v284
    %v293 = vmul.f32 %v292, 0.6931472
    %v294 = vlog2.pop %v285
    %v295 = vmul.f32 %v294, 0.6931472
    %v296 = vmul.f32 %v270, %v293
    %v297 = vmul.f32 %v271, %v295
    %298 = vadd.xlane.f32.xlu0 %v296
    %v299 = vpop.xlane.xlu0 %298
    %300 = vadd.xlane.f32.xlu0 %v297
    %v301 = vpop.xlane.xlu0 %300
    %v302 = vsub.f32 %v290, %v299
    %v303 = vsub.f32 %v291, %v301
    %304 = vadd.xlane.f32.xlu0 %v230
    %v305 = vpop.xlane.xlu0 %304
    %306 = vadd.xlane.f32.xlu0 %v231
    %v307 = vpop.xlane.xlu0 %306
    %v308 = vadd.f32 %v236, %v250
    %v309 = vadd.f32 %v237, %v251
    %v310 = vmul.f32 %v230, %v308
    %v311 = vmul.f32 %v231, %v309
    %312 = vadd.xlane.f32.xlu0 %v310
    %v313 = vpop.xlane.xlu0 %312
    %314 = vadd.xlane.f32.xlu0 %v311
    %v315 = vpop.xlane.xlu0 %314
    %v316 = vmul.f32 %v263, %v305
    %v317 = vmul.f32 %v265, %v307
    %v318 = vsub.f32 %v316, %v313
    %v319 = vsub.f32 %v317, %v315
    %v320 = vadd.f32 %v302, %v318
    %v321 = vadd.f32 %v303, %v319
    %v322 = vmul.f32 %v320, 0.5
    %v323 = vmul.f32 %v321, 0.5
    %v324 = vadd.f32 %v224, %v322
    %v325 = vadd.f32 %v225, %v323
    %v326 = vmul.f32 %v128, %v324
    %v327 = vmul.f32 %v129, %v325
    %vm328 = vcmask 7168
    %329 = vst.msk [vmem:[%s6] sm:$0xff] %vm328, %v326
    %330 = vst.msk [vmem:[%s6 + $0x8] sm:$0xff] %vm328, %v327
    // Predicated region
    $region50: #{tpu_custom_call.1} parent=1 // pred_check
      _
    $region51: #{tpu_custom_call.1} parent=1 // pred_check_branch
      %332 = sbr.rel (0) target = $region53
    $region52: #{tpu_custom_call.1} parent=1 // pred_region
      _
    $region53: #{tpu_custom_call.1} parent=1 // pred_fallthru
      _
    // Predicated region
    $region54: #{tpu_custom_call.1} parent=1 // pred_check
      _
    $region55: #{tpu_custom_call.1} parent=1 // pred_check_branch
      %334 = sbr.rel (0) target = $region57
    $region56: #{tpu_custom_call.1} parent=1 // pred_region
      _
    $region57: #{tpu_custom_call.1} parent=1 // pred_fallthru
      _
    %335 = vsyncpa [#allocation3], 1
    %336 = vsyncpa [#allocation5], 1
    %337 = vsyncpa [#allocation8], 1
    %338 = vsyncpa [#allocation11], 1

</llo_original>
